<compile_context>
chip_gen: v5e
topology: v5e:2x2
jax: 0.10.0
libtpu: 0.0.40
codegen_flags: <defaults>
</compile_context>

<pallas_src>
import math

import jax
import jax.numpy as jnp
from jax.experimental import pallas as pl
from jax.experimental.pallas import tpu as pltpu


def _fused_kernel(x_ref, w_ref, b_ref, o_ref):
    # x_ref: (TR, g*Ci) bf16, w_ref: (g*Ci, g*K*K*Co) bf16 (block-diagonal, BN scale folded),
    # b_ref: (1, g*K*K*Co) f32 (BN shift), o_ref: (TR, g*K*K*Co) bf16.
    y = jnp.dot(x_ref[...], w_ref[...], preferred_element_type=jnp.float32)
    y = y + b_ref[...]                       # epilogue in f32
    o_ref[...] = jnp.maximum(y, 0.0).astype(o_ref.dtype)


def _cdiv(a, b):
    return -(-a // b)


def _round_up(x, m):
    return _cdiv(x, m) * m


def _pick_group(kkco, target_lanes=512):
    """Pixels per GEMM row so the output block last-dim is a multiple of 128 lanes."""
    g = 128 // math.gcd(kkco, 128)
    while g * kkco < target_lanes:
        g *= 2
    return g


def _pick_row_tile(mg, row_bytes, per_buffer_budget=6 << 20, max_tr=1024):
    """Grouped rows per grid step: big (amortize ~0.35us/step) but VMEM-safe on v5e/v6e/v7x."""
    tr = max(8, (per_buffer_budget // max(row_bytes, 1)) // 8 * 8)
    tr = min(tr, max_tr)
    if mg > 8:  # keep >= 2 grid steps so v7x's 2 TensorCores both get work
        tr = min(tr, _round_up(_cdiv(mg, 2), 8))
    return max(8, tr)


def conv_transpose_bn_relu(x_nchw, weight, gamma, beta, running_mean, running_var, eps=1e-5):
    """x_nchw: (N, Ci, H, W); weight: (Ci, Co, K, K) (PyTorch ConvTranspose2d layout)."""
    N, Ci, H, W = x_nchw.shape
    _, Co, K, Kw = weight.shape
    assert K == Kw == 2, "kernel specialized to kernelSize=strideSize=2, padding=0"

    KKCo = K * K * Co
    M = N * H * W

    # --- fold BatchNorm (eval mode): scale -> weight columns; shift stays for the kernel.
    scale = gamma / jnp.sqrt(running_var + eps)                    # (Co,)
    shift = beta - running_mean * scale                            # (Co,)
    # (Ci, Co, K, K) -> (Ci, K, K, Co) -> (Ci, K*K*Co); column = (ki*K+kj)*Co + co
    w_mat = jnp.transpose(weight, (0, 2, 3, 1)).reshape(Ci, KKCo).astype(jnp.float32)
    w_mat = w_mat * jnp.tile(scale, K * K)[None, :]

    # --- group g pixels per GEMM row (block-diagonal weight) for lane-dense loads/stores.
    g = _pick_group(KKCo)
    GCi, GK = g * Ci, g * KKCo
    w_bd = jnp.eye(g, dtype=jnp.float32)[:, None, :, None] * w_mat[None, :, None, :]
    w_bd = w_bd.reshape(GCi, GK).astype(jnp.bfloat16)              # (g*Ci, g*K*K*Co)
    b_full = jnp.tile(shift, g * K * K).reshape(1, GK).astype(jnp.float32)

    # --- rows: NCHW -> NHWC -> (M, Ci), pad to a tile multiple, group, cast to bf16.
    mg = _cdiv(M, g)
    row_bytes = (GCi + GK) * 2                                     # bf16 in + bf16 out per row
    tr = _pick_row_tile(mg, row_bytes)
    steps = _cdiv(mg, tr)
    mp_g = steps * tr
    mp = mp_g * g

    x_mat = jnp.transpose(x_nchw, (0, 2, 3, 1)).reshape(M, Ci)
    if mp > M:
        x_mat = jnp.pad(x_mat, ((0, mp - M), (0, 0)))
    x_g = x_mat.reshape(mp_g, GCi).astype(jnp.bfloat16)            # free row-major view + cast

    # --- VMEM budget: double-buffered in/out tiles + resident weight/shift (+ margin).
    in_blk, out_blk = tr * GCi * 2, tr * GK * 2
    vmem_needed = 2 * (in_blk + out_blk) + 2 * (GCi * GK * 2) + 2 * (GK * 4)
    vmem_limit = int(min(max(vmem_needed + (8 << 20), 32 << 20), 48 << 20))

    out_g = pl.pallas_call(
        _fused_kernel,
        out_shape=jax.ShapeDtypeStruct((mp_g, GK), jnp.bfloat16),
        grid_spec=pltpu.PrefetchScalarGridSpec(
            num_scalar_prefetch=0,
            grid=(steps,),
            in_specs=[
                pl.BlockSpec((tr, GCi), lambda i: (i, 0)),
                pl.BlockSpec((GCi, GK), lambda i: (0, 0)),   # resident, BN-scaled block-diag weight
                pl.BlockSpec((1, GK), lambda i: (0, 0)),     # resident BN shift
            ],
            out_specs=pl.BlockSpec((tr, GK), lambda i: (i, 0)),
        ),
        compiler_params=pltpu.CompilerParams(
            dimension_semantics=("parallel",),
            vmem_limit_bytes=vmem_limit,
        ),
    )(x_g, w_bd, b_full)

    # --- ungroup (free view), drop padding, interleave 2x2 patches, back to NCHW f32
    #     (XLA fuses this chain into a single relayout pass).
    out_mat = out_g.reshape(mp, KKCo)[:M]
    out = out_mat.reshape(N, H, W, K, K, Co)
    out = jnp.transpose(out, (0, 1, 3, 2, 4, 5)).reshape(N, H * K, W * K, Co)
    return jnp.transpose(out, (0, 3, 1, 2)).astype(jnp.float32)


def _reference(x_nchw, weight, gamma, beta, running_mean, running_var, eps=1e-5):
    N, Ci, H, W = x_nchw.shape
    _, Co, K, _ = weight.shape
    # out[n, co, 2i+ki, 2j+kj] = sum_ci x[n, ci, i, j] * W[ci, co, ki, kj]
    y = jnp.einsum('ncij,cokl->noikjl', x_nchw, weight)            # (N, Co, H, K, W, K)
    y = y.reshape(N, Co, H * K, W * K)
    scale = gamma / jnp.sqrt(running_var + eps)
    shift = beta - running_mean * scale
    y = y * scale[None, :, None, None] + shift[None, :, None, None]
    return jnp.maximum(y, 0.0)


if __name__ == "__main__":
    key = jax.random.PRNGKey(0)
    k1, k2, k3, k4, k5, k6 = jax.random.split(key, 6)

    N, Ci, H, W = 2, 4, 16, 16
    Co, K = 8, 2

    x = jax.random.normal(k1, (N, Ci, H, W), dtype=jnp.float32)
    weight = jax.random.normal(k2, (Ci, Co, K, K), dtype=jnp.float32) * 0.1
    gamma = jax.random.normal(k3, (Co,), dtype=jnp.float32) * 0.1 + 1.0
    beta = jax.random.normal(k4, (Co,), dtype=jnp.float32) * 0.1
    running_mean = jax.random.normal(k5, (Co,), dtype=jnp.float32) * 0.1
    running_var = jax.random.uniform(k6, (Co,), dtype=jnp.float32, minval=0.5, maxval=1.5)

    out = conv_transpose_bn_relu(x, weight, gamma, beta, running_mean, running_var)
    out = jax.block_until_ready(out)

    ref = _reference(x, weight, gamma, beta, running_mean, running_var)
    assert out.shape == (N, Co, H * 2, W * 2), out.shape
    # bf16 streamed operands -> loosened tolerance vs the f32 reference.
    assert jnp.allclose(out, ref, atol=3e-2, rtol=3e-2), float(jnp.max(jnp.abs(out - ref)))

    print("KERNEL_OK")
</pallas_src>

<mosaic_0001>
module attributes {stable_mosaic.version = 11 : i64} {
  func.func @_fused_kernel(%arg0: i32, %arg1: memref<16x64xbf16, #tpu.memory_space<vmem>>, %arg2: memref<64x512xbf16, #tpu.memory_space<vmem>>, %arg3: memref<1x512xf32, #tpu.memory_space<vmem>>, %arg4: memref<16x512xbf16, #tpu.memory_space<vmem>>) attributes {dimension_semantics = [#tpu.dimension_semantics<parallel>], iteration_bounds = array<i64: 2>, scalar_prefetch = 0 : i64, scratch_operands = 0 : i64, tpu.core_type = #tpu.core_type<tc>, window_params = [{transform_indices = @transform_0, window_bounds = array<i64: 16, 64>}, {pipeline_mode = #tpu.pipeline_mode<synchronous>, transform_indices = @transform_1, window_bounds = array<i64: 64, 512>}, {pipeline_mode = #tpu.pipeline_mode<synchronous>, transform_indices = @transform_2, window_bounds = array<i64: 1, 512>}, {transform_indices = @transform_3, window_bounds = array<i64: 16, 512>}]} {
    %c0 = arith.constant 0 : index
    %c0_0 = arith.constant 0 : index
    %0 = vector.load %arg1[%c0, %c0_0] : memref<16x64xbf16, #tpu.memory_space<vmem>>, vector<16x64xbf16>
    %c0_1 = arith.constant 0 : index
    %c0_2 = arith.constant 0 : index
    %1 = vector.load %arg2[%c0_1, %c0_2] : memref<64x512xbf16, #tpu.memory_space<vmem>>, vector<64x512xbf16>
    %cst = arith.constant dense<0.000000e+00> : vector<16x512xf32>
    %2 = tpu.matmul %0, %1, %cst {dimension_numbers = #tpu.dot_dimension_numbers<[1], [0], [0], [1], [0, 0, 1, 1], [], []>} : vector<16x64xbf16>, vector<64x512xbf16>, vector<16x512xf32> -> vector<16x512xf32>
    %c0_3 = arith.constant 0 : index
    %c0_4 = arith.constant 0 : index
    %3 = vector.load %arg3[%c0_3, %c0_4] : memref<1x512xf32, #tpu.memory_space<vmem>>, vector<1x512xf32>
    %4 = vector.broadcast %3 : vector<1x512xf32> to vector<16x512xf32>
    %5 = arith.addf %2, %4 : vector<16x512xf32>
    %cst_5 = arith.constant 0.000000e+00 : f32
    %6 = vector.broadcast %cst_5 : f32 to vector<16x512xf32>
    %7 = arith.maximumf %5, %6 : vector<16x512xf32>
    %8 = arith.truncf %7 : vector<16x512xf32> to vector<16x512xbf16>
    %c0_6 = arith.constant 0 : index
    %c0_7 = arith.constant 0 : index
    %9 = vector.load %arg4[%c0_6, %c0_7] : memref<16x512xbf16, #tpu.memory_space<vmem>>, vector<16x512xbf16>
    tpu.vector_store %arg4[%c0_6, %c0_7], %8 {strides = array<i32>} : memref<16x512xbf16, #tpu.memory_space<vmem>>, vector<16x512xbf16>,
    return
  }
  func.func @transform_0(%arg0: i32) -> (i32, i32) {
    %c0_i32 = arith.constant 0 : i32
    %c0_i32_0 = arith.constant 0 : i32
    return %arg0, %c0_i32 : i32, i32
  }
  func.func @transform_1(%arg0: i32) -> (i32, i32) {
    %c0_i32 = arith.constant 0 : i32
    %c0_i32_0 = arith.constant 0 : i32
    %c0_i32_1 = arith.constant 0 : i32
    return %c0_i32, %c0_i32_0 : i32, i32
  }
  func.func @transform_2(%arg0: i32) -> (i32, i32) {
    %c0_i32 = arith.constant 0 : i32
    %c0_i32_0 = arith.constant 0 : i32
    %c0_i32_1 = arith.constant 0 : i32
    return %c0_i32, %c0_i32_0 : i32, i32
  }
  func.func @transform_3(%arg0: i32) -> (i32, i32) {
    %c0_i32 = arith.constant 0 : i32
    %c0_i32_0 = arith.constant 0 : i32
    return %arg0, %c0_i32 : i32, i32
  }
}

</mosaic_0001>

<llo_original>
// kernel: tpu_custom_call.1
$region0: #{tpu_custom_call.1}
  #allocation0 [shape = 'u32[]', space=smem, size = 0x4, offset = 0x4, fixed_abs, tag = 'smem constant byte address 0x4 - core index']
  #allocation1 [shape = 'u32[72,128]{1,0:T(1,128)}', space=vmem, size = 0x9000, scoped, tag = 'internal scratch']
  %s0 = inlined_call_operand.hbm [shape: bf16[32,64], index: 0, kind: input, shape index: {}]
  %s1 = inlined_call_operand.hbm [shape: bf16[64,512], index: 1, kind: input, shape index: {}]
  %s2 = inlined_call_operand.hbm [shape: f32[1,512], index: 2, kind: input, shape index: {}]
  %s3 = inlined_call_operand.hbm [shape: bf16[32,512], index: 3, kind: output, shape index: {}]
  %s4 = sld [smem:[#allocation0]]
  $region57: #{tpu_custom_call.1} parent=0
    _
  %s6 = ssub.s32 1, %s4
  %s7 = scalar_select 0, %s6, %s4
  $region1: #{tpu_custom_call.1} parent=0
    #allocation2 [shape = 'u8[8192]{0}', space=vmem, size = 0x2000, scoped, tag = 'input window, operand 0']
    #allocation3 [shape = 's32[2]{0}', space=sflag, size = 0x8, scoped, tag = 'scoped memory for tpu_custom_call.1']
    #allocation4 [shape = 's32[2]{0}', space=sflag, size = 0x8, scoped, tag = 'scoped memory for tpu_custom_call.1']
    #allocation5 [shape = 'u8[65536]{0}', space=vmem, size = 0x10000, scoped, tag = 'input window, operand 1, single buffered']
    #allocation6 [shape = 's32[1]{0}', space=sflag, size = 0x4, scoped, tag = 'scoped memory for tpu_custom_call.1']
    #allocation7 [shape = 'u8[2048]{0}', space=vmem, size = 0x800, scoped, tag = 'input window, operand 2, single buffered']
    #allocation8 [shape = 'u8[32768]{0}', space=vmem, size = 0x8000, scoped, tag = 'output window, operand 0']
    %8 = vsyncpa [#allocation3], 0
    %s9 = scalar_lea.sflag [#allocation3], 1
    %10 = vsyncpa %s9, 0
    %11 = vsyncpa [#allocation6], 0
    %12 = vsyncpa [#allocation4], 0
    %s13 = scalar_lea.sflag [#allocation4], 1
    %14 = vsyncpa %s13, 0
    loop: start=0, step=1, limit=4
    $region2: #{tpu_custom_call.1} parent=1 // loop_pre_header
      _
    $region3: #{tpu_custom_call.1} parent=1 // loop_header
      %s16 = sphi 0, %s20
      %p17 = scmp.ge.s32.totalorder %s16, 4
      %s26 = sphi 0, %s28
      %s29 = sphi 0, %s26
      %s30 = sphi 0, %s29
      %s46 = sphi 0, %s30
      %s50 = sphi 0, %s50
      %s52 = sphi 0, %s50
      %s53 = sphi 0, %s52
      %s67 = sphi 0, %s53
      %s71 = sphi 0, %s71
      %s73 = sphi 0, %s71
      %s74 = sphi 0, %s73
      %s88 = sphi 0, %s74
      %s94 = sphi 0, %s96
      %s97 = sphi 0, %s94
      %s98 = sphi 0, %s97
      %s114 = sphi 0, %s98
    $region4: #{tpu_custom_call.1} parent=1 // loop_header_branch
      %19 = sbr.rel (%p17) target = $region8
    $region5: #{tpu_custom_call.1} parent=1 // loop_body
      %s21 = ssub.s32 %s16, 1
      %s22 = ssub.s32 %s16, 2
      %s23 = sadd.s32 %s16, 1
      %s24 = ssub.s32 %s16, %s23
      %p25 = scmp.eq.s32.totalorder %s24, 0
      %s27 = sadd.s32 %s26, 1
      %s28 = scalar_select %p25, %s26, %s27
      %p31 = pneg %p25
      %p32 = scmp.eq.s32.totalorder %s16, 1
      %p33 = por %p31, %p32
      %p34 = scmp.ne.s32.totalorder %s26, %s29
      %p35 = scmp.eq.s32.totalorder %s16, 0
      %p36 = por %p34, %p35
      %p37 = scmp.ne.s32.totalorder %s26, %s29
      %p38 = scmp.eq.s32.totalorder %s21, 1
      %p39 = por %p37, %p38
      %p40 = scmp.ne.s32.totalorder %s29, %s30
      %p41 = scmp.eq.s32.totalorder %s21, 0
      %p42 = por %p40, %p41
      %p43 = scmp.ne.s32.totalorder %s29, %s30
      %p44 = scmp.eq.s32.totalorder %s22, 1
      %p45 = por %p43, %p44
      %p47 = scmp.ne.s32.totalorder %s30, %s46
      %p48 = scmp.eq.s32.totalorder %s22, 0
      %p49 = por %p47, %p48
      %s51 = sadd.s32 %s50, 1
      %p54 = scmp.eq.s32.totalorder %s16, 1
      %p55 = scmp.ne.s32.totalorder %s50, %s52
      %p56 = scmp.eq.s32.totalorder %s16, 0
      %p57 = por %p55, %p56
      %p58 = scmp.ne.s32.totalorder %s50, %s52
      %p59 = scmp.eq.s32.totalorder %s21, 1
      %p60 = por %p58, %p59
      %p61 = scmp.ne.s32.totalorder %s52, %s53
      %p62 = scmp.eq.s32.totalorder %s21, 0
      %p63 = por %p61, %p62
      %p64 = scmp.ne.s32.totalorder %s52, %s53
      %p65 = scmp.eq.s32.totalorder %s22, 1
      %p66 = por %p64, %p65
      %p68 = scmp.ne.s32.totalorder %s53, %s67
      %p69 = scmp.eq.s32.totalorder %s22, 0
      %p70 = por %p68, %p69
      %s72 = sadd.s32 %s71, 1
      %p75 = scmp.eq.s32.totalorder %s16, 1
      %p76 = scmp.ne.s32.totalorder %s71, %s73
      %p77 = scmp.eq.s32.totalorder %s16, 0
      %p78 = por %p76, %p77
      %p79 = scmp.ne.s32.totalorder %s71, %s73
      %p80 = scmp.eq.s32.totalorder %s21, 1
      %p81 = por %p79, %p80
      %p82 = scmp.ne.s32.totalorder %s73, %s74
      %p83 = scmp.eq.s32.totalorder %s21, 0
      %p84 = por %p82, %p83
      %p85 = scmp.ne.s32.totalorder %s73, %s74
      %p86 = scmp.eq.s32.totalorder %s22, 1
      %p87 = por %p85, %p86
      %p89 = scmp.ne.s32.totalorder %s74, %s88
      %p90 = scmp.eq.s32.totalorder %s22, 0
      %p91 = por %p89, %p90
      %s92 = ssub.s32 %s16, %s23
      %p93 = scmp.eq.s32.totalorder %s92, 0
      %s95 = sadd.s32 %s94, 1
      %s96 = scalar_select %p93, %s94, %s95
      %p99 = pneg %p93
      %p100 = scmp.eq.s32.totalorder %s16, 1
      %p101 = por %p99, %p100
      %p102 = scmp.ne.s32.totalorder %s94, %s97
      %p103 = scmp.eq.s32.totalorder %s16, 0
      %p104 = por %p102, %p103
      %p105 = scmp.ne.s32.totalorder %s94, %s97
      %p106 = scmp.eq.s32.totalorder %s21, 1
      %p107 = por %p105, %p106
      %p108 = scmp.ne.s32.totalorder %s97, %s98
      %p109 = scmp.eq.s32.totalorder %s21, 0
      %p110 = por %p108, %p109
      %p111 = scmp.ne.s32.totalorder %s97, %s98
      %p112 = scmp.eq.s32.totalorder %s22, 1
      %p113 = por %p111, %p112
      %p115 = scmp.ne.s32.totalorder %s98, %s114
      %p116 = scmp.eq.s32.totalorder %s22, 0
      %p117 = por %p115, %p116
      %p118 = scmp.le.s32.totalorder 1, %s16
      %p119 = scmp.lt.s32.totalorder %s16, 3
      %p120 = pnand %p118, %p119
      %p121 = pneg %p120
      // Predicated region
      $region9: #{tpu_custom_call.1} parent=5 // pred_check
        _
      $region10: #{tpu_custom_call.1} parent=5 // pred_check_branch
        %123 = sbr.rel (%p120) target = $region12
      $region11: #{tpu_custom_call.1} parent=5 // pred_region
        %s124 = ssub.s32 %s16, 1
        // Predicated region
        $region13: #{tpu_custom_call.1} parent=11 // pred_check
          %p125 = pneg %p63
        $region14: #{tpu_custom_call.1} parent=11 // pred_check_branch
          %127 = sbr.rel (%p125) target = $region16
        $region15: #{tpu_custom_call.1} parent=11 // pred_region
          %129 = vsyncadd [#allocation6], 0
          %s130 = sshll.u32 %s1, 4
          %s131 = int_to_ptr.hbm [resolvable:$true] %s130
          %s132 = sshll.u32 [#allocation5], 4
          %s133 = int_to_ptr.vmem [resolvable:$true] %s132
          %138 = dma.hbm_to_vmem [thread:$0]  %s131, 2048, %s133, [#allocation6], 256, 256, 16
        $region16: #{tpu_custom_call.1} parent=11 // pred_fallthru
          _
        // Predicated region
        $region17: #{tpu_custom_call.1} parent=11 // pred_check
          %p139 = pneg %p84
        $region18: #{tpu_custom_call.1} parent=11 // pred_check_branch
          %141 = sbr.rel (%p139) target = $region20
        $region19: #{tpu_custom_call.1} parent=11 // pred_region
          %143 = vsyncadd [#allocation6], 0
          %s145 = sshll.u32 %s2, 4
          %s146 = int_to_ptr.hbm [resolvable:$true] %s145
          %s147 = sshll.u32 [#allocation7], 4
          %s148 = int_to_ptr.vmem [resolvable:$true] %s147
          %150 = dma.hbm_to_vmem [thread:$0]  %s146, 64, %s148, [#allocation6]
        $region20: #{tpu_custom_call.1} parent=11 // pred_fallthru
          _
      $region12: #{tpu_custom_call.1} parent=5 // pred_fallthru
        _
      %p151 = scmp.lt.s32.totalorder %s16, 2
      // Predicated region
      $region21: #{tpu_custom_call.1} parent=5 // pred_check
        %p152 = pneg %p151
      $region22: #{tpu_custom_call.1} parent=5 // pred_check_branch
        %154 = sbr.rel (%p152) target = $region24
      $region23: #{tpu_custom_call.1} parent=5 // pred_region
        // Predicated region
        $region25: #{tpu_custom_call.1} parent=23 // pred_check
          %p155 = pneg %p36
        $region26: #{tpu_custom_call.1} parent=23 // pred_check_branch
          %157 = sbr.rel (%p155) target = $region28
        $region27: #{tpu_custom_call.1} parent=23 // pred_region
          %s158 = sand.u32 %s26, 1
          %s159 = scalar_lea.sflag [#allocation3], %s158
          %s160 = sand.u32 %s26, 1
          %s161 = smul.addr %s160, 8
          %s162 = scalar_lea.vmem [#allocation2], %s161
          %s163 = smul.u32 2, %s16
          %165 = vsyncadd %s159, 0
          %s166 = smul.addr %s163, 4
          %s167 = scalar_lea.hbm %s0, %s166
          %s168 = sshll.u32 %s167, 4
          %s169 = int_to_ptr.hbm [resolvable:$true] %s168
          %s170 = sshll.u32 %s162, 4
          %s171 = int_to_ptr.vmem [resolvable:$true] %s170
          %176 = dma.hbm_to_vmem [thread:$0]  %s169, 128, %s171, %s159, 64, 64, 4
        $region28: #{tpu_custom_call.1} parent=23 // pred_fallthru
          _
      $region24: #{tpu_custom_call.1} parent=5 // pred_fallthru
        _
      %p177 = scmp.le.s32.totalorder 1, %s16
      %p178 = scmp.lt.s32.totalorder %s16, 3
      %p179 = pnand %p177, %p178
      %p180 = pneg %p179
      // Predicated region
      $region29: #{tpu_custom_call.1} parent=5 // pred_check
        _
      $region30: #{tpu_custom_call.1} parent=5 // pred_check_branch
        %182 = sbr.rel (%p179) target = $region32
      $region31: #{tpu_custom_call.1} parent=5 // pred_region
        %s183 = ssub.s32 %s16, 1
        %s184 = sand.u32 %s29, 1
        %s185 = scalar_lea.sflag [#allocation3], %s184
        %s186 = sand.u32 %s29, 1
        %s187 = smul.addr %s186, 8
        %s188 = scalar_lea.vmem [#allocation2], %s187
        // Predicated region
        $region33: #{tpu_custom_call.1} parent=31 // pred_check
          %p189 = pneg %p42
        $region34: #{tpu_custom_call.1} parent=31 // pred_check_branch
          %191 = sbr.rel (%p189) target = $region36
        $region35: #{tpu_custom_call.1} parent=31 // pred_region
          %193 = dma.done %s185, 128
        $region36: #{tpu_custom_call.1} parent=31 // pred_fallthru
          _
        // Predicated region
        $region37: #{tpu_custom_call.1} parent=31 // pred_check
          %p194 = pneg %p63
        $region38: #{tpu_custom_call.1} parent=31 // pred_check_branch
          %196 = sbr.rel (%p194) target = $region40
        $region39: #{tpu_custom_call.1} parent=31 // pred_region
          %198 = dma.done [#allocation6], 2048
        $region40: #{tpu_custom_call.1} parent=31 // pred_fallthru
          _
        // Predicated region
        $region41: #{tpu_custom_call.1} parent=31 // pred_check
          %p199 = pneg %p84
        $region42: #{tpu_custom_call.1} parent=31 // pred_check_branch
          %201 = sbr.rel (%p199) target = $region44
        $region43: #{tpu_custom_call.1} parent=31 // pred_region
          %203 = dma.done [#allocation6], 64
        $region44: #{tpu_custom_call.1} parent=31 // pred_fallthru
          _
        %s204 = sand.u32 %s29, 1
        %s205 = scalar_lea.sflag [#allocation3], %s204
        %s206 = sand.u32 %s29, 1
        %s207 = smul.addr %s206, 8
        %s208 = scalar_lea.vmem [#allocation2], %s207
        %p209 = pneg %p42
        %p210 = pneg %p39
        %p211 = pneg %p63
        %p212 = pneg %p60
        %p213 = pneg %p84
        %p214 = pneg %p81
        %p215 = pneg %p110
        %p216 = pneg %p107
        %s217 = sand.u32 %s97, 1
        %s218 = scalar_lea.sflag [#allocation4], %s217
        %s219 = sand.u32 %s97, 1
        %s220 = smul.addr %s219, 32
        %s221 = scalar_lea.vmem [#allocation8], %s220
        %s222 = smul.u32 2, %s21
        %s223 = smul.u32 2, %s21
        %v225 = vld [vmem:[%s188] sm:$0xf]
        %v226 = vld [vmem:[%s188 + $0x4] sm:$0xf]
        %v227 = vld [vmem:[#allocation5] sm:$0xff]
        %v228 = vld [vmem:[#allocation5 + $0x8] sm:$0xff]
        %v229 = vld [vmem:[#allocation5 + $0x10] sm:$0xff]
        %v230 = vld [vmem:[#allocation5 + $0x18] sm:$0xff]
        %v231 = vld [vmem:[#allocation5 + $0x20] sm:$0xff]
        %v232 = vld [vmem:[#allocation5 + $0x28] sm:$0xff]
        %v233 = vld [vmem:[#allocation5 + $0x30] sm:$0xff]
        %v234 = vld [vmem:[#allocation5 + $0x38] sm:$0xff]
        %v235 = vld [vmem:[#allocation5 + $0x40] sm:$0xff]
        %v236 = vld [vmem:[#allocation5 + $0x48] sm:$0xff]
        %v237 = vld [vmem:[#allocation5 + $0x50] sm:$0xff]
        %v238 = vld [vmem:[#allocation5 + $0x58] sm:$0xff]
        %v239 = vld [vmem:[#allocation5 + $0x60] sm:$0xff]
        %v240 = vld [vmem:[#allocation5 + $0x68] sm:$0xff]
        %v241 = vld [vmem:[#allocation5 + $0x70] sm:$0xff]
        %v242 = vld [vmem:[#allocation5 + $0x78] sm:$0xff]
        %v243 = vld [vmem:[#allocation7] sm:$0xf]
        %v245 = vperm.slane %v243, 0
        %v246 = vperm.slane %v243, 1
        %v247 = vperm.slane %v243, 2
        %v248 = vperm.slane %v243, 3
        %v255 = vunpack.c.l.b16 %v225
        %v256 = vunpack.c.l.b16 %v226
        %v257 = vpack.c.b16 %v256, %v255
        %v274 = vunpack.c.l.b16 %v227
        %v275 = vunpack.c.h.b16 %v227
        %v276 = vunpack.c.l.b16 %v228
        %v277 = vunpack.c.h.b16 %v228
        %v278 = vunpack.c.l.b16 %v229
        %v279 = vunpack.c.h.b16 %v229
        %v280 = vunpack.c.l.b16 %v230
        %v281 = vunpack.c.h.b16 %v230
        %v282 = vunpack.c.l.b16 %v231
        %v283 = vunpack.c.h.b16 %v231
        %v284 = vunpack.c.l.b16 %v232
        %v285 = vunpack.c.h.b16 %v232
        %v286 = vunpack.c.l.b16 %v233
        %v287 = vunpack.c.h.b16 %v233
        %v288 = vunpack.c.l.b16 %v234
        %v289 = vunpack.c.h.b16 %v234
        %v290 = vunpack.c.l.b16 %v235
        %v291 = vunpack.c.h.b16 %v235
        %v292 = vunpack.c.l.b16 %v236
        %v293 = vunpack.c.h.b16 %v236
        %v294 = vunpack.c.l.b16 %v237
        %v295 = vunpack.c.h.b16 %v237
        %v296 = vunpack.c.l.b16 %v238
        %v297 = vunpack.c.h.b16 %v238
        %v298 = vunpack.c.l.b16 %v239
        %v299 = vunpack.c.h.b16 %v239
        %v300 = vunpack.c.l.b16 %v240
        %v301 = vunpack.c.h.b16 %v240
        %v302 = vunpack.c.l.b16 %v241
        %v303 = vunpack.c.h.b16 %v241
        %v304 = vunpack.c.l.b16 %v242
        %v305 = vunpack.c.h.b16 %v242
        %v306 = vpack.c.b16 %v278, %v274
        %v307 = vpack.c.b16 %v279, %v275
        %v308 = vpack.c.b16 %v280, %v276
        %v309 = vpack.c.b16 %v281, %v277
        %v310 = vpack.c.b16 %v286, %v282
        %v311 = vpack.c.b16 %v287, %v283
        %v312 = vpack.c.b16 %v288, %v284
        %v313 = vpack.c.b16 %v289, %v285
        %v314 = vpack.c.b16 %v294, %v290
        %v315 = vpack.c.b16 %v295, %v291
        %v316 = vpack.c.b16 %v296, %v292
        %v317 = vpack.c.b16 %v297, %v293
        %v318 = vpack.c.b16 %v302, %v298
        %v319 = vpack.c.b16 %v303, %v299
        %v320 = vpack.c.b16 %v304, %v300
        %v321 = vpack.c.b16 %v305, %v301
        %vm338 = vcmask 523264
        %v340 = vsel %vm338, %v257, 0
        %342 = vmatpush.bf16.msra.mxu0 0
        %343 = vmatpush.bf16.msra.mxu0 0
        %344 = vmatpush.bf16.msra.mxu0 0
        %345 = vmatpush.bf16.msra.mxu0 0
        %346 = vmatpush.bf16.msra.mxu0 %v318
        %347 = vmatpush.bf16.msra.mxu0 %v314
        %348 = vmatpush.bf16.msra.mxu0 %v310
        %349 = vmatpush.bf16.msra.mxu0 %v306
        %350 = vmatmul.bf16.gmra.mxu0 %v340
        %v351 = vpop.f32.mrf.mxu0
        %v352 = vadd.f32 %v245, %v351
        %v353 = vpop.f32.mrf.mxu0
        %v354 = vadd.f32 %v245, %v353
        %355 = vdwg.mxu0
        %356 = vmatpush.bf16.msra.mxu0 0
        %357 = vmatpush.bf16.msra.mxu0 0
        %358 = vmatpush.bf16.msra.mxu0 0
        %359 = vmatpush.bf16.msra.mxu0 0
        %360 = vmatpush.bf16.msra.mxu0 %v319
        %361 = vmatpush.bf16.msra.mxu0 %v315
        %362 = vmatpush.bf16.msra.mxu0 %v311
        %363 = vmatpush.bf16.msra.mxu0 %v307
        %364 = vmatmul.bf16.gmra.mxu0 %v340
        %v365 = vpop.f32.mrf.mxu0
        %v366 = vadd.f32 %v246, %v365
        %v367 = vpop.f32.mrf.mxu0
        %v368 = vadd.f32 %v246, %v367
        %369 = vdwg.mxu0
        %370 = vmatpush.bf16.msra.mxu0 0
        %371 = vmatpush.bf16.msra.mxu0 0
        %372 = vmatpush.bf16.msra.mxu0 0
        %373 = vmatpush.bf16.msra.mxu0 0
        %374 = vmatpush.bf16.msra.mxu0 %v320
        %375 = vmatpush.bf16.msra.mxu0 %v316
        %376 = vmatpush.bf16.msra.mxu0 %v312
        %377 = vmatpush.bf16.msra.mxu0 %v308
        %378 = vmatmul.bf16.gmra.mxu0 %v340
        %v379 = vpop.f32.mrf.mxu0
        %v380 = vadd.f32 %v247, %v379
        %v381 = vpop.f32.mrf.mxu0
        %v382 = vadd.f32 %v247, %v381
        %383 = vdwg.mxu0
        %384 = vmatpush.bf16.msra.mxu0 0
        %385 = vmatpush.bf16.msra.mxu0 0
        %386 = vmatpush.bf16.msra.mxu0 0
        %387 = vmatpush.bf16.msra.mxu0 0
        %388 = vmatpush.bf16.msra.mxu0 %v321
        %389 = vmatpush.bf16.msra.mxu0 %v317
        %390 = vmatpush.bf16.msra.mxu0 %v313
        %391 = vmatpush.bf16.msra.mxu0 %v309
        %392 = vmatmul.bf16.gmra.mxu0 %v340
        %v393 = vpop.f32.mrf.mxu0
        %v394 = vadd.f32 %v248, %v393
        %v395 = vpop.f32.mrf.mxu0
        %v396 = vadd.f32 %v248, %v395
        %397 = vdwg.mxu0
        %v398 = vmax.f32 %v352, 0.0
        %v399 = vmax.f32 %v366, 0.0
        %v400 = vmax.f32 %v380, 0.0
        %v401 = vmax.f32 %v394, 0.0
        %v402 = vmax.f32 %v354, 0.0
        %v403 = vmax.f32 %v368, 0.0
        %v404 = vmax.f32 %v382, 0.0
        %v405 = vmax.f32 %v396, 0.0
        %v406 = vpack.c.bf16 %v399, %v398
        %v407 = vpack.c.bf16 %v401, %v400
        %v408 = vpack.c.bf16 %v403, %v402
        %v409 = vpack.c.bf16 %v405, %v404
        %410 = vst [vmem:[%s221] sm:$0xff] %v406
        %411 = vst [vmem:[%s221 + $0x8] sm:$0xff] %v407
        %412 = vst [vmem:[%s221 + $0x10] sm:$0xff] %v408
        %413 = vst [vmem:[%s221 + $0x18] sm:$0xff] %v409
        %s414 = sand.u32 %s97, 1
        %s415 = scalar_lea.sflag [#allocation4], %s414
        %s416 = sand.u32 %s97, 1
        %s417 = smul.addr %s416, 32
        %s418 = scalar_lea.vmem [#allocation8], %s417
        // Predicated region
        $region45: #{tpu_custom_call.1} parent=31 // pred_check
          %p419 = pneg %p107
        $region46: #{tpu_custom_call.1} parent=31 // pred_check_branch
          %421 = sbr.rel (%p419) target = $region48
        $region47: #{tpu_custom_call.1} parent=31 // pred_region
          %s422 = smul.u32 2, %s21
          %424 = vsyncadd %s415, 0
          %s425 = smul.addr %s422, 4
          %s426 = smul.addr %s425, 4
          %s427 = scalar_lea.hbm %s3, %s426
          %s428 = sshll.u32 %s418, 4
          %s429 = int_to_ptr.vmem [resolvable:$true] %s428
          %s430 = sshll.u32 %s427, 4
          %s431 = int_to_ptr.hbm [resolvable:$true] %s430
          %436 = dma.vmem_to_hbm [thread:$0]  %s429, 512, %s431, %s415, 256, 256, 16
        $region48: #{tpu_custom_call.1} parent=31 // pred_fallthru
          _
      $region32: #{tpu_custom_call.1} parent=5 // pred_fallthru
        _
      %p437 = scmp.le.s32.totalorder 2, %s16
      // Predicated region
      $region49: #{tpu_custom_call.1} parent=5 // pred_check
        %p438 = pneg %p437
      $region50: #{tpu_custom_call.1} parent=5 // pred_check_branch
        %440 = sbr.rel (%p438) target = $region52
      $region51: #{tpu_custom_call.1} parent=5 // pred_region
        %s441 = ssub.s32 %s16, 2
        // Predicated region
        $region53: #{tpu_custom_call.1} parent=51 // pred_check
          %p442 = pneg %p113
        $region54: #{tpu_custom_call.1} parent=51 // pred_check_branch
          %444 = sbr.rel (%p442) target = $region56
        $region55: #{tpu_custom_call.1} parent=51 // pred_region
          %s445 = sand.u32 %s98, 1
          %s446 = scalar_lea.sflag [#allocation4], %s445
          %s447 = sand.u32 %s98, 1
          %s448 = smul.addr %s447, 32
          %s449 = scalar_lea.vmem [#allocation8], %s448
          %451 = dma.done %s446, 512
        $region56: #{tpu_custom_call.1} parent=51 // pred_fallthru
          _
      $region52: #{tpu_custom_call.1} parent=5 // pred_fallthru
        _
    $region6: #{tpu_custom_call.1} parent=1 // loop_footer
      %s20 = sadd.s32 1, %s16
    $region7: #{tpu_custom_call.1} parent=1 // loop_footer_branch
      %15 = sbr.rel target = $region3
    $region8: #{tpu_custom_call.1} parent=1 // loop_exit
      _
    %452 = vsyncpa [#allocation3], 1
    %s453 = scalar_lea.sflag [#allocation3], 1
    %454 = vsyncpa %s453, 1
    %455 = vsyncpa [#allocation6], 1
    %456 = vsyncpa [#allocation4], 1
    %s457 = scalar_lea.sflag [#allocation4], 1
    %458 = vsyncpa %s457, 1

</llo_original>
